<compile_context>
chip_gen: v7x
topology: tpu7x:2x2x1
jax: 0.10.0
libtpu: 0.0.40
codegen_flags: <defaults>
</compile_context>

<pallas_src>
import functools

import jax
import jax.numpy as jnp
from jax import lax
from jax.experimental import pallas as pl
from jax.experimental.pallas import tpu as pltpu


LANES = 128


def _cdiv(a, b):
    return -(-a // b)


def _detect_tpu_kind():
    try:
        dev = jax.devices()[0]
        if dev.platform != "tpu":
            return ""
        return (getattr(dev, "device_kind", "") or "").lower()
    except Exception:
        return ""


_KIND = _detect_tpu_kind()
_IS_V7 = ("v7" in _KIND) or ("7x" in _KIND)
# v5e / v6e are single-TensorCore: a second reduction chain is pure overhead.
_NUM_CORES = 2 if _IS_V7 else 1
# ~1 MiB f32 blocks (2 MiB on v7x) amortize the ~0.35 us per-grid-step overhead.
_MAX_BLOCK_ROWS = 4096 if _IS_V7 else 2048
# bf16 softplus halves EUP work for the gan/ragan path on chips with a bf16 EUP.
# TODO(synk): also profitable on v6e (bf16 EUP); kept f32 there for exact parity.
_BF16_SOFTPLUS = _IS_V7


def _elem_loss(x, gan_type, label_val, bf16_softplus):
    """Per-element GAN loss in f32 (x is f32). Shared by kernel, tail and tiny path."""
    if gan_type in ("gan", "ragan"):
        # BCEWithLogitsLoss vs constant label t, numerically stable:
        #   max(x, 0) - x*t + log(1 + exp(-|x|))
        t = jnp.float32(label_val)
        neg_abs = -jnp.abs(x)
        if bf16_softplus:
            u = jnp.exp(neg_abs.astype(jnp.bfloat16))
            softplus = jnp.log(u + 1.0).astype(jnp.float32)
        else:
            softplus = jnp.log(1.0 + jnp.exp(neg_abs))
        return jnp.maximum(x, 0.0) - x * t + softplus
    if gan_type == "lsgan":
        d = x - jnp.float32(label_val)
        return d * d
    if gan_type == "wgan-gp":
        # loss = -mean(x) if real else mean(x); label_val carries the sign.
        return x * jnp.float32(label_val)
    raise NotImplementedError("GAN type [{:s}] is not found".format(gan_type))


def _gan_loss_kernel(x_ref, o_ref, *, gan_type, label_val, block_rows,
                     blocks_per_core, n_rows, any_mask, bf16_softplus):
    if blocks_per_core is None:           # single reduction chain, 1-D grid
        v = pl.program_id(0)
        is_first = v == 0
    else:                                 # 2 TensorCores: (core, step) grid
        p = pl.program_id(0)
        i = pl.program_id(1)
        v = p * blocks_per_core + i
        is_first = i == 0

    # Output block is resident across the reduction axis -> it is the accumulator.
    @pl.when(is_first)
    def _():
        o_ref[...] = jnp.zeros_like(o_ref)

    x = x_ref[...].astype(jnp.float32)
    elem = _elem_loss(x, gan_type, label_val, bf16_softplus)

    if any_mask:
        # Cheap row-only mask: (block_rows, 1) iota broadcast across lanes.
        row = lax.broadcasted_iota(jnp.int32, (block_rows, 1), 0)
        keep = (v * block_rows + row) < n_rows
        elem = jnp.where(keep, elem, 0.0)

    # (block_rows, 128) -> (8, 128): grouping of whole (8,128) vreg tiles, pure
    # VALU adds.  TODO(synk): confirm with pl.lower_as_mlir that no VMEM copy is
    # materialized; if one is, switch to pl.ds(k*8, 8) slice accumulation.
    o_ref[...] += jnp.sum(elem.reshape(block_rows // 8, 8, LANES), axis=0)


def _partial_sums(slab, *, full_rows, gan_type, label_val, bf16_softplus,
                  num_cores, use_core_parallel, deep_buffering):
    itemsize = jnp.dtype(slab.dtype).itemsize
    sub = max(8, 32 // max(1, itemsize))           # f32: 8, bf16: 16, int8/fp8: 32
    block_rows = min(_MAX_BLOCK_ROWS, (full_rows // sub) * sub)
    total_blocks = _cdiv(full_rows, block_rows)
    if total_blocks < 2:
        num_cores = 1
    blocks_per_core = _cdiv(total_blocks, num_cores)
    padded_rows = num_cores * blocks_per_core * block_rows
    any_mask = padded_rows != full_rows

    kernel = functools.partial(
        _gan_loss_kernel,
        gan_type=gan_type, label_val=label_val, block_rows=block_rows,
        blocks_per_core=blocks_per_core if num_cores > 1 else None,
        n_rows=full_rows, any_mask=any_mask, bf16_softplus=bf16_softplus)

    spec_kwargs = {}
    if deep_buffering and hasattr(pl, "Buffered"):
        spec_kwargs["pipeline_mode"] = pl.Buffered(3)

    if num_cores > 1:
        grid = (num_cores, blocks_per_core)

        def in_map(p, i):
            # Clamp out-of-range virtual blocks (odd block count on core 1);
            # they re-read the last real block and are fully masked to zero.
            return (jnp.minimum(p * blocks_per_core + i, total_blocks - 1), 0)

        out_map = lambda p, i: (p, 0)
        lead = getattr(pltpu, "CORE_PARALLEL", "parallel") if use_core_parallel \
            else "parallel"
        dims = (lead, "arbitrary")
    else:
        grid = (total_blocks,)
        in_map = lambda i: (i, 0)
        out_map = lambda i: (0, 0)
        dims = ("arbitrary",)

    uses_eup = gan_type in ("gan", "ragan")
    cost = pl.CostEstimate(
        flops=5 * full_rows * LANES,
        transcendentals=(2 * full_rows * LANES) if uses_eup else 0,
        bytes_accessed=full_rows * LANES * itemsize + num_cores * 8 * LANES * 4)

    return pl.pallas_call(
        kernel,
        out_shape=jax.ShapeDtypeStruct((num_cores * 8, LANES), jnp.float32),
        grid_spec=pltpu.PrefetchScalarGridSpec(
            num_scalar_prefetch=0,
            grid=grid,
            in_specs=[pl.BlockSpec((block_rows, LANES), in_map, **spec_kwargs)],
            out_specs=pl.BlockSpec((8, LANES), out_map),
        ),
        compiler_params=pltpu.CompilerParams(dimension_semantics=dims),
        cost_estimate=cost,
    )(slab)


def gan_loss_pallas(x, target_is_real, *, gan_type,
                    real_label_val=1.0, fake_label_val=0.0):
    """Mean GAN loss of `x` (any shape/dtype) against a constant target label."""
    gan_type = gan_type.lower()
    if gan_type not in ("gan", "ragan", "lsgan", "wgan-gp"):
        raise NotImplementedError("GAN type [{:s}] is not found".format(gan_type))

    if gan_type == "wgan-gp":
        label_val = -1.0 if target_is_real else 1.0
    else:
        label_val = float(real_label_val if target_is_real else fake_label_val)

    n_elems = int(x.size)
    flat = jnp.ravel(x)                       # keep input dtype (bf16 halves HBM bytes)
    full_rows = n_elems // LANES
    rem = n_elems - full_rows * LANES

    # <128-element tail: tiny plain-JAX sum instead of padding the whole array.
    tail_sum = jnp.float32(0.0)
    if rem:
        tail = flat[full_rows * LANES:].astype(jnp.float32)
        tail_sum = jnp.sum(_elem_loss(tail, gan_type, label_val, False))

    itemsize = jnp.dtype(flat.dtype).itemsize
    sub = max(8, 32 // max(1, itemsize))
    if full_rows < sub:
        # Tiny input: a kernel launch costs more than the whole reduction.
        body_sum = jnp.float32(0.0)
        if full_rows:
            body = flat[: full_rows * LANES].astype(jnp.float32)
            body_sum = jnp.sum(_elem_loss(body, gan_type, label_val, False))
        return (body_sum + tail_sum) / jnp.float32(n_elems)

    if rem:
        slab = flat[: full_rows * LANES].reshape(full_rows, LANES)
    else:
        slab = flat.reshape(full_rows, LANES)  # free, contiguous reshape

    common = dict(full_rows=full_rows, gan_type=gan_type, label_val=label_val)
    if _IS_V7:
        try:
            partials = _partial_sums(
                slab, bf16_softplus=_BF16_SOFTPLUS and gan_type in ("gan", "ragan"),
                num_cores=_NUM_CORES, use_core_parallel=True,
                deep_buffering=True, **common)
        except Exception:
            # Robust fallback: single chain, f32 softplus, default double-buffering.
            partials = _partial_sums(
                slab, bf16_softplus=False, num_cores=1,
                use_core_parallel=False, deep_buffering=False, **common)
    else:
        partials = _partial_sums(
            slab, bf16_softplus=False, num_cores=1,
            use_core_parallel=False, deep_buffering=False, **common)

    return (jnp.sum(partials) + tail_sum) / jnp.float32(n_elems)


def _reference_loss(x, target_is_real, gan_type,
                    real_label_val=1.0, fake_label_val=0.0):
    x = x.astype(jnp.float32)
    gan_type = gan_type.lower()
    if gan_type == "wgan-gp":
        return -jnp.mean(x) if target_is_real else jnp.mean(x)
    t = jnp.float32(real_label_val if target_is_real else fake_label_val)
    if gan_type in ("gan", "ragan"):
        elem = jnp.maximum(x, 0.0) - x * t + jnp.log1p(jnp.exp(-jnp.abs(x)))
        return jnp.mean(elem)
    if gan_type == "lsgan":
        return jnp.mean((x - t) ** 2)
    raise NotImplementedError(gan_type)


if __name__ == "__main__":
    key = jax.random.PRNGKey(0)
    # Discriminator-style logits: lane-aligned NCHW case + a ragged case that
    # exercises the partial last block and the plain-JAX tail path.
    shapes = [(2, 4, 16, 16),     # 2048 elements (multiple of 128)
              (2, 3, 13, 17)]     # 1326 elements: 10 full rows + 46-element tail

    ok = True
    for shape in shapes:
        key, sub = jax.random.split(key)
        x = jax.random.normal(sub, shape, dtype=jnp.float32)
        for gan_type in ("gan", "ragan", "lsgan", "wgan-gp"):
            for target_is_real in (True, False):
                got = jax.block_until_ready(
                    gan_loss_pallas(x, target_is_real, gan_type=gan_type))
                want = _reference_loss(x, target_is_real, gan_type)
                tol = 3e-3 if (_BF16_SOFTPLUS and gan_type in ("gan", "ragan")) \
                    else 1e-5
                if not jnp.allclose(got, want, rtol=tol, atol=tol):
                    ok = False
                    print(f"MISMATCH shape={shape} {gan_type} "
                          f"real={target_is_real}: {got} vs {want}")

    if ok:
        print("KERNEL_OK")
</pallas_src>

<mosaic_0001>
module attributes {stable_mosaic.version = 11 : i64} {
  func.func @_gan_loss_kernel(%arg0: i32, %arg1: memref<16x128xf32, #tpu.memory_space<vmem>>, %arg2: memref<8x128xf32, #tpu.memory_space<vmem>>) attributes {dimension_semantics = [#tpu.dimension_semantics<arbitrary>], iteration_bounds = array<i64: 1>, scalar_prefetch = 0 : i64, scratch_operands = 0 : i64, tpu.core_type = #tpu.core_type<tc>, window_params = [{transform_indices = @transform_0, window_bounds = array<i64: 16, 128>}, {pipeline_mode = #tpu.pipeline_mode<synchronous>, transform_indices = @transform_1, window_bounds = array<i64: 8, 128>}]} {
    %c0_i32 = arith.constant 0 : i32
    %0 = arith.cmpi eq, %arg0, %c0_i32 : i32
    %1 = arith.extui %0 : i1 to i32
    %c0_i32_0 = arith.constant 0 : i32
    %2 = arith.cmpi ne, %1, %c0_i32_0 : i32
    scf.if %2 {
      %cst_10 = arith.constant 0.000000e+00 : f32
      %22 = vector.broadcast %cst_10 : f32 to vector<8x128xf32>
      %c0_11 = arith.constant 0 : index
      %c0_12 = arith.constant 0 : index
      %23 = vector.load %arg2[%c0_11, %c0_12] : memref<8x128xf32, #tpu.memory_space<vmem>>, vector<8x128xf32>
      tpu.vector_store %arg2[%c0_11, %c0_12], %22 {strides = array<i32>} : memref<8x128xf32, #tpu.memory_space<vmem>>, vector<8x128xf32>,
    } else {
    }
    %c0 = arith.constant 0 : index
    %c0_1 = arith.constant 0 : index
    %3 = vector.load %arg1[%c0, %c0_1] : memref<16x128xf32, #tpu.memory_space<vmem>>, vector<16x128xf32>
    %4 = math.absf %3 : vector<16x128xf32>
    %cst = arith.constant 0.000000e+00 : f32
    %5 = vector.broadcast %cst : f32 to vector<16x128xf32>
    %6 = arith.subf %5, %4 : vector<16x128xf32>
    %7 = math.exp %6 : vector<16x128xf32>
    %cst_2 = arith.constant 1.000000e+00 : f32
    %8 = vector.broadcast %cst_2 : f32 to vector<16x128xf32>
    %9 = arith.addf %8, %7 : vector<16x128xf32>
    %10 = math.log %9 : vector<16x128xf32>
    %cst_3 = arith.constant 0.000000e+00 : f32
    %11 = vector.broadcast %cst_3 : f32 to vector<16x128xf32>
    %12 = arith.maximumf %3, %11 : vector<16x128xf32>
    %cst_4 = arith.constant 1.000000e+00 : f32
    %13 = vector.broadcast %cst_4 : f32 to vector<16x128xf32>
    %14 = arith.mulf %3, %13 : vector<16x128xf32>
    %15 = arith.subf %12, %14 : vector<16x128xf32>
    %16 = arith.addf %15, %10 : vector<16x128xf32>
    %c0_5 = arith.constant 0 : index
    %c0_6 = arith.constant 0 : index
    %17 = vector.load %arg2[%c0_5, %c0_6] : memref<8x128xf32, #tpu.memory_space<vmem>>, vector<8x128xf32>
    %18 = vector.shape_cast %16 : vector<16x128xf32> to vector<2x8x128xf32>
    %cst_7 = arith.constant dense<0.000000e+00> : vector<8x128xf32>
    %19 = vector.multi_reduction <add>, %18, %cst_7 [0] : vector<2x8x128xf32> to vector<8x128xf32>
    %20 = arith.addf %17, %19 : vector<8x128xf32>
    %c0_8 = arith.constant 0 : index
    %c0_9 = arith.constant 0 : index
    %21 = vector.load %arg2[%c0_8, %c0_9] : memref<8x128xf32, #tpu.memory_space<vmem>>, vector<8x128xf32>
    tpu.vector_store %arg2[%c0_8, %c0_9], %20 {strides = array<i32>} : memref<8x128xf32, #tpu.memory_space<vmem>>, vector<8x128xf32>,
    return
  }
  func.func @transform_0(%arg0: i32) -> (i32, i32) {
    %c0_i32 = arith.constant 0 : i32
    %c0_i32_0 = arith.constant 0 : i32
    return %arg0, %c0_i32 : i32, i32
  }
  func.func @transform_1(%arg0: i32) -> (i32, i32) {
    %c0_i32 = arith.constant 0 : i32
    %c0_i32_0 = arith.constant 0 : i32
    %c0_i32_1 = arith.constant 0 : i32
    return %c0_i32, %c0_i32_0 : i32, i32
  }
}

</mosaic_0001>

<llo_original>
// kernel: tpu_custom_call.1
$region0: #{tpu_custom_call.1}
  #allocation0 [shape = 'u32[]', space=smem, size = 0x4, offset = 0x4, fixed_abs, tag = 'smem constant byte address 0x4 - core index']
  #allocation1 [shape = 'u32[144,128]{1,0:T(1,128)}', space=vmem, size = 0x12000, scoped, tag = 'internal scratch']
  %s0 = inlined_call_operand.hbm [shape: f32[16,128], index: 0, kind: input, shape index: {}]
  %s1 = inlined_call_operand.hbm [shape: f32[8,128], index: 1, kind: output, shape index: {}]
  %s2 = sld [smem:[#allocation0]]
  $region22: #{tpu_custom_call.1} parent=0
    _
  %s4 = ssub.s32 1, %s2
  %s5 = scalar_select 0, %s4, %s2
  $region1: #{tpu_custom_call.1} parent=0
    #allocation2 [shape = 'u8[8192]{0}', space=vmem, size = 0x2000, scoped, tag = 'input window, operand 0, single buffered']
    #allocation3 [shape = 's32[1]{0}', space=sflag, size = 0x4, scoped, tag = 'scoped memory for tpu_custom_call.1']
    #allocation4 [shape = 's32[1]{0}', space=sflag, size = 0x4, scoped, tag = 'scoped memory for tpu_custom_call.1']
    #allocation5 [shape = 'u8[4096]{0}', space=vmem, size = 0x1000, scoped, tag = 'output window, operand 0, single buffered']
    %6 = vsyncpa [#allocation3], 0
    %7 = vsyncpa [#allocation4], 0
    // Predicated region
    $region2: #{tpu_custom_call.1} parent=1 // pred_check
      _
    $region3: #{tpu_custom_call.1} parent=1 // pred_check_branch
      %9 = sbr.rel (0) target = $region5
    $region4: #{tpu_custom_call.1} parent=1 // pred_region
      %s11 = ssub.s32 256, 256
      %12 = vsyncadd [#allocation3], %s11
      %s13 = sshll.u32 [#allocation2], 4
      %s14 = int_to_ptr.vmem [resolvable:$true] %s13
      %19 = dma.hbm_to_vmem [thread:$0]  %s0, 256, %s14, [#allocation3], 128, 128, 8
    $region5: #{tpu_custom_call.1} parent=1 // pred_fallthru
      _
    // Predicated region
    $region6: #{tpu_custom_call.1} parent=1 // pred_check
      _
    $region7: #{tpu_custom_call.1} parent=1 // pred_check_branch
      %21 = sbr.rel (0) target = $region9
    $region8: #{tpu_custom_call.1} parent=1 // pred_region
      %22 = dma.done [#allocation3], 256
    $region9: #{tpu_custom_call.1} parent=1 // pred_fallthru
      _
    %p23 = scmp.eq.s32.totalorder 0, 0
    // Predicated region
    $region10: #{tpu_custom_call.1} parent=1 // pred_check
      %p24 = pneg %p23
    $region11: #{tpu_custom_call.1} parent=1 // pred_check_branch
      %26 = sbr.rel (%p24) target = $region13
    $region12: #{tpu_custom_call.1} parent=1 // pred_region
      %27 = vst [vmem:[#allocation5] sm:$0xff] 0.0
    $region13: #{tpu_custom_call.1} parent=1 // pred_fallthru
      _
    %v28 = vld [vmem:[#allocation2] sm:$0xff]
    %v29 = vld [vmem:[#allocation2 + $0x8] sm:$0xff]
    %v30 = vand.u32 2147483647, %v28
    %v31 = vand.u32 2147483647, %v29
    %v32 = vsub.f32 0.0, %v30
    %v33 = vsub.f32 0.0, %v31
    %v34 = vmul.f32 %v32, 1.442695
    %v35 = vpow.pop %v34
    %v36 = vmul.f32 %v33, 1.442695
    %v37 = vpow.pop %v36
    %v38 = vadd.f32 %v35, 1.0
    %v39 = vadd.f32 %v37, 1.0
    %v40 = vlog2.pop %v38
    %v41 = vmul.f32 %v40, 0.6931472
    %v42 = vlog2.pop %v39
    %v43 = vmul.f32 %v42, 0.6931472
    %v44 = vmax.f32 %v28, 0.0
    %v45 = vmax.f32 %v29, 0.0
    %v46 = vsub.f32 %v44, %v28
    %v47 = vsub.f32 %v45, %v29
    %v48 = vadd.f32 %v46, %v41
    %v49 = vadd.f32 %v47, %v43
    %v50 = vld [vmem:[#allocation5] sm:$0xff]
    %v51 = vadd.f32 %v48, %v49
    %v52 = vadd.f32 %v50, %v51
    %53 = vst [vmem:[#allocation5] sm:$0xff] %v52
    // Predicated region
    $region14: #{tpu_custom_call.1} parent=1 // pred_check
      _
    $region15: #{tpu_custom_call.1} parent=1 // pred_check_branch
      %55 = sbr.rel (0) target = $region17
    $region16: #{tpu_custom_call.1} parent=1 // pred_region
      %s57 = ssub.s32 128, 128
      %58 = vsyncadd [#allocation4], %s57
      %s60 = sshll.u32 [#allocation5], 4
      %s61 = int_to_ptr.vmem [resolvable:$true] %s60
      %63 = dma.vmem_to_hbm [thread:$0]  %s61, 128, %s1, [#allocation4]
    $region17: #{tpu_custom_call.1} parent=1 // pred_fallthru
      _
    // Predicated region
    $region18: #{tpu_custom_call.1} parent=1 // pred_check
      _
    $region19: #{tpu_custom_call.1} parent=1 // pred_check_branch
      %65 = sbr.rel (0) target = $region21
    $region20: #{tpu_custom_call.1} parent=1 // pred_region
      %66 = dma.done [#allocation4], 128
    $region21: #{tpu_custom_call.1} parent=1 // pred_fallthru
      _
    %67 = vsyncpa [#allocation3], 1
    %68 = vsyncpa [#allocation4], 1

</llo_original>
